<compile_context>
chip_gen: v5e
topology: v5e:2x2
jax: 0.10.0
libtpu: 0.0.40
codegen_flags: <defaults>
</compile_context>

<pallas_src>
import jax
import jax.numpy as jnp
from jax import lax
from jax.experimental import pallas as pl
from jax.experimental.pallas import tpu as pltpu


def _round_up(v, m):
    return ((v + m - 1) // m) * m


def _pick_tile(dim, max_tile, unit):
    """Largest multiple of `unit` <= max_tile that divides round_up(dim, unit)."""
    padded = _round_up(dim, unit)
    t = min(max_tile, padded)
    t = (t // unit) * unit
    while padded % t != 0:
        t -= unit
    return t, padded


def _dense_kernel(x_ref, w_ref, b_ref, o_ref, acc_ref):
    """One (tm, tn) output tile; K is the innermost (arbitrary) grid axis."""
    k = pl.program_id(2)

    @pl.when(k == 0)
    def _():
        acc_ref[...] = jnp.zeros_like(acc_ref)

    # x tile: (tm, tk); w tile in PyTorch (out, in) layout: (tn, tk).
    # Contract the K axis of both -> (tm, tn); no weight transpose in HBM.
    acc_ref[...] += lax.dot_general(
        x_ref[...], w_ref[...],
        dimension_numbers=(((1,), (1,)), ((), ())),
        preferred_element_type=jnp.float32)

    @pl.when(k == pl.num_programs(2) - 1)
    def _():
        # Bias added exactly once per output tile, in f32, in the epilogue.
        o_ref[...] = (acc_ref[...] + b_ref[...].astype(jnp.float32)).astype(o_ref.dtype)


def _dense_kernel_single_k(x_ref, w_ref, b_ref, o_ref):
    """Single-K-step specialization: no scratch accumulator, direct store."""
    acc = lax.dot_general(
        x_ref[...], w_ref[...],
        dimension_numbers=(((1,), (1,)), ((), ())),
        preferred_element_type=jnp.float32)
    o_ref[...] = (acc + b_ref[...].astype(jnp.float32)).astype(o_ref.dtype)


def _dense_pallas(x, weight, bias, *, tm=256, tn=256, tk=512, matmul_dtype=None):
    """Tiled y = x @ W.T + b with W in PyTorch (D_out, D_in) layout."""
    B, D_in = x.shape
    D_out, _ = weight.shape
    out_dtype = x.dtype

    # Optional bf16 MXU feed (v6e/v7x fast path); accumulation stays f32.
    if matmul_dtype is not None:
        x = x.astype(matmul_dtype)
        weight = weight.astype(matmul_dtype)

    # Tile selection: N/K tiles divide the 128-aligned dims exactly (no wasted
    # lanes / contraction work); M simply pads up to tm.
    tn, Np = _pick_tile(D_out, tn, 128)
    tk, Kp = _pick_tile(D_in, tk, 128)
    tm = min(tm, _round_up(B, 8))
    Mp = _round_up(B, tm)

    if (Mp, Kp) != (B, D_in):
        x = jnp.pad(x, ((0, Mp - B), (0, Kp - D_in)))
    if (Np, Kp) != (D_out, D_in):
        weight = jnp.pad(weight, ((0, Np - D_out), (0, Kp - D_in)))

    b2 = jnp.zeros((1, Np), jnp.float32)
    if bias is not None:
        b2 = b2.at[0, :D_out].set(bias.astype(jnp.float32))

    k_steps = Kp // tk

    flops = 2 * Mp * Np * Kp
    bytes_accessed = (x.size * x.dtype.itemsize
                      + weight.size * weight.dtype.itemsize
                      + b2.size * 4
                      + Mp * Np * jnp.dtype(out_dtype).itemsize)

    if k_steps == 1:
        kernel = _dense_kernel_single_k
        grid = (Mp // tm, Np // tn)
        in_specs = [
            pl.BlockSpec((tm, tk), lambda i, j: (i, 0)),   # x
            pl.BlockSpec((tn, tk), lambda i, j: (j, 0)),   # W (out, in)
            pl.BlockSpec((1, tn), lambda i, j: (0, j)),    # bias (per-N only)
        ]
        out_spec = pl.BlockSpec((tm, tn), lambda i, j: (i, j))
        scratch_shapes = []
        dim_sem = ("parallel", "parallel")
    else:
        kernel = _dense_kernel
        grid = (Mp // tm, Np // tn, k_steps)
        in_specs = [
            pl.BlockSpec((tm, tk), lambda i, j, k: (i, k)),   # x
            pl.BlockSpec((tn, tk), lambda i, j, k: (j, k)),   # W (out, in)
            pl.BlockSpec((1, tn), lambda i, j, k: (0, j)),    # bias (per-N only)
        ]
        out_spec = pl.BlockSpec((tm, tn), lambda i, j, k: (i, j))
        scratch_shapes = [pltpu.VMEM((tm, tn), jnp.float32)]
        dim_sem = ("parallel", "parallel", "arbitrary")

    out = pl.pallas_call(
        kernel,
        out_shape=jax.ShapeDtypeStruct((Mp, Np), out_dtype),
        grid_spec=pltpu.PrefetchScalarGridSpec(
            num_scalar_prefetch=0,
            grid=grid,
            in_specs=in_specs,
            out_specs=out_spec,
            scratch_shapes=scratch_shapes,
        ),
        compiler_params=pltpu.CompilerParams(
            dimension_semantics=dim_sem,
        ),
        cost_estimate=pl.CostEstimate(
            flops=flops, transcendentals=0, bytes_accessed=bytes_accessed),
    )(x, weight, b2)

    return out[:B, :D_out]


def dense_forward(x, weight, bias=None, *, matmul_dtype=None, use_pallas=None,
                  min_kernel_work=1 << 18):
    """Pallas equivalent of Dense.forward.

    x      : (B, D_in)
    weight : (D_out, D_in)  -- PyTorch nn.Linear layout (never transposed in HBM)
    bias   : (D_out,) or None
    returns: (B, D_out), or (B,) if D_out == 1 (torch.squeeze(dim=-1) semantics)
    """
    B, D_in = x.shape
    D_out = weight.shape[0]

    if use_pallas is None:
        # Auto: tiny problems and the D_out==1 matvec go to plain XLA where
        # pallas_call fixed overhead / MXU N-padding would dominate.
        use_pallas = (B * D_in * D_out >= min_kernel_work) and D_out > 1

    if use_pallas:
        out = _dense_pallas(x, weight, bias, matmul_dtype=matmul_dtype)
    else:
        out = jnp.dot(x, weight.T)
        if bias is not None:
            out = out + bias
        out = out.astype(x.dtype)

    # torch.squeeze(output, dim=-1): drop last axis only if it has size 1.
    if D_out == 1:
        out = jnp.squeeze(out, axis=-1)
    return out


def xavier_uniform(key, out_features, in_features, dtype=jnp.float32):
    # Matches torch.nn.init.xavier_uniform_ on an (out, in) weight matrix.
    bound = (6.0 / (in_features + out_features)) ** 0.5
    return jax.random.uniform(
        key, (out_features, in_features), dtype=dtype, minval=-bound, maxval=bound)


if __name__ == "__main__":
    key = jax.random.PRNGKey(0)
    k_x, k_w, k_x2, k_w2 = jax.random.split(key, 4)

    # --- Small-shape test (forced through the Pallas kernel, single-K path) ---
    batch, input_size, output_size = 8, 32, 16
    x = jax.random.normal(k_x, (batch, input_size), dtype=jnp.float32)
    weight = xavier_uniform(k_w, output_size, input_size)   # (D_out, D_in)
    bias = jnp.zeros((output_size,), dtype=jnp.float32)     # 'zeros' initializer

    ref = jnp.dot(x, weight.T, precision=jax.lax.Precision.HIGHEST) + bias
    out = jax.block_until_ready(dense_forward(x, weight, bias, use_pallas=True))
    assert out.shape == (batch, output_size)
    assert jnp.allclose(out, ref, atol=2e-2, rtol=2e-2), \
        float(jnp.max(jnp.abs(out - ref)))

    # --- Multi-tile test (grid = (2, 3, 2), accumulator / epilogue path) ---
    B2, D_in2, D_out2 = 512, 1024, 384
    x2 = jax.random.normal(k_x2, (B2, D_in2), dtype=jnp.float32)
    w2 = xavier_uniform(k_w2, D_out2, D_in2)
    b2 = jnp.zeros((D_out2,), dtype=jnp.float32)

    ref2 = jnp.dot(x2, w2.T, precision=jax.lax.Precision.HIGHEST) + b2
    out2 = jax.block_until_ready(dense_forward(x2, w2, b2, use_pallas=True))
    assert out2.shape == (B2, D_out2)
    assert jnp.allclose(out2, ref2, atol=2e-2, rtol=2e-2), \
        float(jnp.max(jnp.abs(out2 - ref2)))

    # bf16-fed MXU path (f32 accumulation) — the fast path on v6e/v7x.
    out2_bf16 = jax.block_until_ready(
        dense_forward(x2, w2, b2, matmul_dtype=jnp.bfloat16, use_pallas=True))
    assert out2_bf16.shape == (B2, D_out2)
    assert jnp.allclose(out2_bf16, ref2, atol=1e-1, rtol=5e-2), \
        float(jnp.max(jnp.abs(out2_bf16 - ref2)))

    # D_out == 1 squeeze path (auto-dispatches to plain XLA).
    x_small = jax.random.normal(jax.random.PRNGKey(1), (8, 32), dtype=jnp.float32)
    w_small = xavier_uniform(jax.random.PRNGKey(2), 1, 32)
    b_small = jnp.zeros((1,), dtype=jnp.float32)
    out_small = jax.block_until_ready(dense_forward(x_small, w_small, b_small))
    assert out_small.shape == (8,)

    print("KERNEL_OK")
</pallas_src>

<mosaic_0001>
module attributes {stable_mosaic.version = 11 : i64} {
  func.func @_dense_kernel_single_k(%arg0: i32, %arg1: i32, %arg2: memref<8x128xf32, #tpu.memory_space<vmem>>, %arg3: memref<128x128xf32, #tpu.memory_space<vmem>>, %arg4: memref<1x128xf32, #tpu.memory_space<vmem>>, %arg5: memref<8x128xf32, #tpu.memory_space<vmem>>) attributes {dimension_semantics = [#tpu.dimension_semantics<parallel>, #tpu.dimension_semantics<parallel>], iteration_bounds = array<i64: 1, 1>, scalar_prefetch = 0 : i64, scratch_operands = 0 : i64, tpu.core_type = #tpu.core_type<tc>, window_params = [{transform_indices = @transform_0, window_bounds = array<i64: 8, 128>}, {transform_indices = @transform_1, window_bounds = array<i64: 128, 128>}, {transform_indices = @transform_2, window_bounds = array<i64: 1, 128>}, {transform_indices = @transform_3, window_bounds = array<i64: 8, 128>}]} {
    %c0 = arith.constant 0 : index
    %c0_0 = arith.constant 0 : index
    %0 = vector.load %arg2[%c0, %c0_0] : memref<8x128xf32, #tpu.memory_space<vmem>>, vector<8x128xf32>
    %c0_1 = arith.constant 0 : index
    %c0_2 = arith.constant 0 : index
    %1 = vector.load %arg3[%c0_1, %c0_2] : memref<128x128xf32, #tpu.memory_space<vmem>>, vector<128x128xf32>
    %cst = arith.constant dense<0.000000e+00> : vector<8x128xf32>
    %2 = tpu.matmul %0, %1, %cst {dimension_numbers = #tpu.dot_dimension_numbers<[1], [1], [0], [0], [0, 0, 1, 0], [], []>} : vector<8x128xf32>, vector<128x128xf32>, vector<8x128xf32> -> vector<8x128xf32>
    %c0_3 = arith.constant 0 : index
    %c0_4 = arith.constant 0 : index
    %3 = vector.load %arg4[%c0_3, %c0_4] : memref<1x128xf32, #tpu.memory_space<vmem>>, vector<1x128xf32>
    %4 = vector.broadcast %3 : vector<1x128xf32> to vector<8x128xf32>
    %5 = arith.addf %2, %4 : vector<8x128xf32>
    %c0_5 = arith.constant 0 : index
    %c0_6 = arith.constant 0 : index
    %6 = vector.load %arg5[%c0_5, %c0_6] : memref<8x128xf32, #tpu.memory_space<vmem>>, vector<8x128xf32>
    tpu.vector_store %arg5[%c0_5, %c0_6], %5 {strides = array<i32>} : memref<8x128xf32, #tpu.memory_space<vmem>>, vector<8x128xf32>,
    return
  }
  func.func @transform_0(%arg0: i32, %arg1: i32) -> (i32, i32) {
    %c0_i32 = arith.constant 0 : i32
    %c0_i32_0 = arith.constant 0 : i32
    return %arg0, %c0_i32 : i32, i32
  }
  func.func @transform_1(%arg0: i32, %arg1: i32) -> (i32, i32) {
    %c0_i32 = arith.constant 0 : i32
    %c0_i32_0 = arith.constant 0 : i32
    return %arg1, %c0_i32 : i32, i32
  }
  func.func @transform_2(%arg0: i32, %arg1: i32) -> (i32, i32) {
    %c0_i32 = arith.constant 0 : i32
    %c0_i32_0 = arith.constant 0 : i32
    return %c0_i32, %arg1 : i32, i32
  }
  func.func @transform_3(%arg0: i32, %arg1: i32) -> (i32, i32) {
    %c0_i32 = arith.constant 0 : i32
    return %arg0, %arg1 : i32, i32
  }
}

</mosaic_0001>

<llo_original>
// kernel: tpu_custom_call.1
$region0: #{tpu_custom_call.1}
  #allocation0 [shape = 'u32[]', space=smem, size = 0x4, offset = 0x4, fixed_abs, tag = 'smem constant byte address 0x4 - core index']
  #allocation1 [shape = 'u32[72,128]{1,0:T(1,128)}', space=vmem, size = 0x9000, scoped, tag = 'internal scratch']
  %s0 = inlined_call_operand.hbm [shape: f32[8,128], index: 0, kind: input, shape index: {}]
  %s1 = inlined_call_operand.hbm [shape: f32[128,128], index: 1, kind: input, shape index: {}]
  %s2 = inlined_call_operand.vmem [shape: f32[1,128], index: 2, kind: input, shape index: {}]
  %s3 = inlined_call_operand.hbm [shape: f32[8,128], index: 3, kind: output, shape index: {}]
  %s4 = sld [smem:[#allocation0]]
  $region30: #{tpu_custom_call.1} parent=0
    _
  %s6 = ssub.s32 1, %s4
  %s7 = scalar_select 0, %s6, %s4
  $region1: #{tpu_custom_call.1} parent=0
    #allocation2 [shape = 'u8[4096]{0}', space=vmem, size = 0x1000, scoped, tag = 'input window, operand 0, single buffered']
    #allocation3 [shape = 's32[1]{0}', space=sflag, size = 0x4, scoped, tag = 'scoped memory for tpu_custom_call.1']
    #allocation4 [shape = 's32[1]{0}', space=sflag, size = 0x4, scoped, tag = 'scoped memory for tpu_custom_call.1']
    #allocation5 [shape = 'u8[65536]{0}', space=vmem, size = 0x10000, scoped, tag = 'input window, operand 1, single buffered']
    #allocation6 [shape = 's32[1]{0}', space=sflag, size = 0x4, scoped, tag = 'scoped memory for tpu_custom_call.1']
    #allocation7 [shape = 'u8[4096]{0}', space=vmem, size = 0x1000, scoped, tag = 'output window, operand 0, single buffered']
    %8 = vsyncpa [#allocation3], 0
    %9 = vsyncpa [#allocation6], 0
    %10 = vsyncpa [#allocation4], 0
    // Predicated region
    $region2: #{tpu_custom_call.1} parent=1 // pred_check
      _
    $region3: #{tpu_custom_call.1} parent=1 // pred_check_branch
      %12 = sbr.rel (0) target = $region5
    $region4: #{tpu_custom_call.1} parent=1 // pred_region
      %14 = vsyncadd [#allocation3], 0
      %s16 = sshll.u32 %s0, 4
      %s17 = int_to_ptr.hbm [resolvable:$true] %s16
      %s18 = sshll.u32 [#allocation2], 4
      %s19 = int_to_ptr.vmem [resolvable:$true] %s18
      %21 = dma.hbm_to_vmem [thread:$0]  %s17, 128, %s19, [#allocation3]
    $region5: #{tpu_custom_call.1} parent=1 // pred_fallthru
      _
    // Predicated region
    $region6: #{tpu_custom_call.1} parent=1 // pred_check
      _
    $region7: #{tpu_custom_call.1} parent=1 // pred_check_branch
      %23 = sbr.rel (0) target = $region9
    $region8: #{tpu_custom_call.1} parent=1 // pred_region
      %25 = vsyncadd [#allocation6], 0
      %s26 = sshll.u32 %s1, 4
      %s27 = int_to_ptr.hbm [resolvable:$true] %s26
      %s28 = sshll.u32 [#allocation5], 4
      %s29 = int_to_ptr.vmem [resolvable:$true] %s28
      %34 = dma.hbm_to_vmem [thread:$0]  %s27, 2048, %s29, [#allocation6], 128, 128, 8
    $region9: #{tpu_custom_call.1} parent=1 // pred_fallthru
      _
    // Predicated region
    $region10: #{tpu_custom_call.1} parent=1 // pred_check
      _
    $region11: #{tpu_custom_call.1} parent=1 // pred_check_branch
      %36 = sbr.rel (0) target = $region13
    $region12: #{tpu_custom_call.1} parent=1 // pred_region
      _
    $region13: #{tpu_custom_call.1} parent=1 // pred_fallthru
      _
    // Predicated region
    $region14: #{tpu_custom_call.1} parent=1 // pred_check
      _
    $region15: #{tpu_custom_call.1} parent=1 // pred_check_branch
      %38 = sbr.rel (0) target = $region17
    $region16: #{tpu_custom_call.1} parent=1 // pred_region
      %40 = dma.done [#allocation3], 128
    $region17: #{tpu_custom_call.1} parent=1 // pred_fallthru
      _
    // Predicated region
    $region18: #{tpu_custom_call.1} parent=1 // pred_check
      _
    $region19: #{tpu_custom_call.1} parent=1 // pred_check_branch
      %42 = sbr.rel (0) target = $region21
    $region20: #{tpu_custom_call.1} parent=1 // pred_region
      %44 = dma.done [#allocation6], 2048
    $region21: #{tpu_custom_call.1} parent=1 // pred_fallthru
      _
    %v45 = vld [vmem:[#allocation2] sm:$0xff]
    %v46 = vld [vmem:[#allocation5] sm:$0xff]
    %v47 = vld [vmem:[#allocation5 + $0x8] sm:$0xff]
    %v48 = vld [vmem:[#allocation5 + $0x10] sm:$0xff]
    %v49 = vld [vmem:[#allocation5 + $0x18] sm:$0xff]
    %v50 = vld [vmem:[#allocation5 + $0x20] sm:$0xff]
    %v51 = vld [vmem:[#allocation5 + $0x28] sm:$0xff]
    %v52 = vld [vmem:[#allocation5 + $0x30] sm:$0xff]
    %v53 = vld [vmem:[#allocation5 + $0x38] sm:$0xff]
    %v54 = vld [vmem:[#allocation5 + $0x40] sm:$0xff]
    %v55 = vld [vmem:[#allocation5 + $0x48] sm:$0xff]
    %v56 = vld [vmem:[#allocation5 + $0x50] sm:$0xff]
    %v57 = vld [vmem:[#allocation5 + $0x58] sm:$0xff]
    %v58 = vld [vmem:[#allocation5 + $0x60] sm:$0xff]
    %v59 = vld [vmem:[#allocation5 + $0x68] sm:$0xff]
    %v60 = vld [vmem:[#allocation5 + $0x70] sm:$0xff]
    %v61 = vld [vmem:[#allocation5 + $0x78] sm:$0xff]
    %v62 = vld [vmem:[%s2] sm:$0x1]
    %v64 = vperm.slane %v62, 0
    %66 = vmatpush.xpose.msra.mxu0 %v61
    %67 = vmatpush.xpose.msra.mxu0 %v60
    %68 = vmatpush.xpose.msra.mxu0 %v59
    %69 = vmatpush.xpose.msra.mxu0 %v58
    %70 = vmatpush.xpose.msra.mxu0 %v57
    %71 = vmatpush.xpose.msra.mxu0 %v56
    %72 = vmatpush.xpose.msra.mxu0 %v55
    %73 = vmatpush.xpose.msra.mxu0 %v54
    %74 = vmatpush.xpose.msra.mxu0 %v53
    %75 = vmatpush.xpose.msra.mxu0 %v52
    %76 = vmatpush.xpose.msra.mxu0 %v51
    %77 = vmatpush.xpose.msra.mxu0 %v50
    %78 = vmatpush.xpose.msra.mxu0 %v49
    %79 = vmatpush.xpose.msra.mxu0 %v48
    %80 = vmatpush.xpose.msra.mxu0 %v47
    %81 = vmatpush.xpose.msra.mxu0 %v46
    %82 = vmatmul.f32.gmra.mxu0 %v45
    %v83 = vpop.f32.mrf.mxu0
    %v84 = vadd.f32 %v64, %v83
    %85 = vdwg.mxu0
    %86 = vst [vmem:[#allocation7] sm:$0xff] %v84
    // Predicated region
    $region22: #{tpu_custom_call.1} parent=1 // pred_check
      _
    $region23: #{tpu_custom_call.1} parent=1 // pred_check_branch
      %88 = sbr.rel (0) target = $region25
    $region24: #{tpu_custom_call.1} parent=1 // pred_region
      %90 = vsyncadd [#allocation4], 0
      %s92 = sshll.u32 [#allocation7], 4
      %s93 = int_to_ptr.vmem [resolvable:$true] %s92
      %s94 = sshll.u32 %s3, 4
      %s95 = int_to_ptr.hbm [resolvable:$true] %s94
      %97 = dma.vmem_to_hbm [thread:$0]  %s93, 128, %s95, [#allocation4]
    $region25: #{tpu_custom_call.1} parent=1 // pred_fallthru
      _
    // Predicated region
    $region26: #{tpu_custom_call.1} parent=1 // pred_check
      _
    $region27: #{tpu_custom_call.1} parent=1 // pred_check_branch
      %99 = sbr.rel (0) target = $region29
    $region28: #{tpu_custom_call.1} parent=1 // pred_region
      %101 = dma.done [#allocation4], 128
    $region29: #{tpu_custom_call.1} parent=1 // pred_fallthru
      _
    %102 = vsyncpa [#allocation3], 1
    %103 = vsyncpa [#allocation6], 1
    %104 = vsyncpa [#allocation4], 1

</llo_original>
